<compile_context>
chip_gen: v6e
topology: v6e:2x2x1
jax: 0.10.0
libtpu: 0.0.40
codegen_flags: <defaults>
</compile_context>

<pallas_src>
from functools import partial

import jax
import jax.numpy as jnp
from jax.experimental import pallas as pl
from jax.experimental.pallas import tpu as pltpu


LANE = 128            # fused-head output padded to a multiple of the lane width
MAX_BATCH_TILE = 4096  # rows per grid step for large batches (amortizes step overhead)


def _round_up(x, m):
    return ((x + m - 1) // m) * m


def _cdiv(a, b):
    return -(-a // b)


def _choose_batch_tile(B):
    """Pick the batch tile: big tiles for overhead amortization, >=2 grid steps
    for B>16 (v7x has 2 TensorCores), minimal padding waste, multiple of 8."""
    if B <= 16:
        return _round_up(max(B, 1), 8)
    n_steps = max(2, _cdiv(B, MAX_BATCH_TILE))
    return _round_up(_cdiv(B, n_steps), 8)


def _forward_kernel(obs_ref, w1_ref, b1_ref, wh_ref, bh_ref, out_ref):
    # obs arrives as f32; cast to bf16 in-kernel (VPU cast hides under MXU/DMA).
    x = obs_ref[...].astype(jnp.bfloat16)

    # hidden layer: (TB, obs_dim)bf16 @ (obs_dim, H)bf16 -> (TB, H)f32, +bias, ReLU
    h = jnp.dot(x, w1_ref[...], preferred_element_type=jnp.float32)
    h = jnp.maximum(h + b1_ref[...], 0.0)

    # fused policy+value head: (TB, H)bf16 @ (H, N_pad)bf16 -> (TB, N_pad)f32
    # N_pad is a multiple of 128 -> lane-dense, unmasked stores; store as bf16.
    o = jnp.dot(h.astype(jnp.bfloat16), wh_ref[...],
                preferred_element_type=jnp.float32)
    out_ref[...] = (o + bh_ref[...]).astype(out_ref.dtype)


def prepare_params(params):
    """One-time weight preparation: fuse policy+value heads, pad to a
    lane-dense width, cast matmul operands to bf16. Do this at init, not per
    forward call."""
    H = params["w1"].shape[1]
    A = params["wp"].shape[1]
    n_heads = A + 1
    n_pad = _round_up(n_heads, LANE)

    w_heads = jnp.concatenate([params["wp"], params["wv"]], axis=1)   # (H, A+1)
    b_heads = jnp.concatenate([params["bp"], params["bv"]], axis=1)   # (1, A+1)
    w_heads = jnp.pad(w_heads, ((0, 0), (0, n_pad - n_heads)))
    b_heads = jnp.pad(b_heads, ((0, 0), (0, n_pad - n_heads)))

    prepped = {
        "w1": params["w1"].astype(jnp.bfloat16),   # (obs_dim, H) bf16
        "b1": params["b1"].astype(jnp.float32),    # (1, H) f32
        "wh": w_heads.astype(jnp.bfloat16),        # (H, n_pad) bf16
        "bh": b_heads.astype(jnp.float32),         # (1, n_pad) f32
    }
    meta = {"action_dim": A, "hidden": H, "n_pad": n_pad}
    return prepped, meta


@partial(jax.jit, static_argnames=("action_dim",))
def _forward_jit(obs, w1, b1, wh, bh, *, action_dim):
    B, obs_dim = obs.shape
    H = w1.shape[1]
    n_pad = wh.shape[1]

    tb = _choose_batch_tile(B)
    b_pad = _round_up(B, tb)
    if b_pad != B:
        obs = jnp.pad(obs, ((0, b_pad - B), (0, 0)))
    grid = (b_pad // tb,)

    out = pl.pallas_call(
        _forward_kernel,
        out_shape=jax.ShapeDtypeStruct((b_pad, n_pad), jnp.bfloat16),
        grid=grid,
        in_specs=[
            pl.BlockSpec((tb, obs_dim), lambda i: (i, 0)),   # obs tile (pipelined, f32)
            pl.BlockSpec((obs_dim, H), lambda i: (0, 0)),    # W1 (resident)
            pl.BlockSpec((1, H), lambda i: (0, 0)),          # b1 (resident)
            pl.BlockSpec((H, n_pad), lambda i: (0, 0)),      # fused W_heads (resident)
            pl.BlockSpec((1, n_pad), lambda i: (0, 0)),      # fused b_heads (resident)
        ],
        out_specs=pl.BlockSpec((tb, n_pad), lambda i: (i, 0)),
        compiler_params=pltpu.CompilerParams(
            dimension_semantics=("parallel",)),
    )(obs, w1, b1, wh, bh)

    policy = out[:B, :action_dim].astype(jnp.float32)
    value = out[:B, action_dim:action_dim + 1].astype(jnp.float32)
    return policy, value


def model_base_forward(obs, prepped, meta, state=None, seq_len=None, mask=None):
    """ModelBase.forward as a single fused Pallas call.

    obs:     (B, obs_dim) float-ish
    prepped: output of prepare_params (bf16 weights, fused/padded head)
    meta:    {'action_dim', 'hidden', 'n_pad'}
    returns dict {'policy': (B,A) f32, 'value': (B,1) f32, 'return': (B,1) f32}
    """
    # TODO(synk): state/seq_len/mask are unused in this feed-forward MLP realization.
    A = meta["action_dim"]
    B = obs.shape[0]
    if B == 0:  # empty-batch guard (avoids tb=0 / zero-size grid)
        z = jnp.zeros((0, 1), jnp.float32)
        return {"policy": jnp.zeros((0, A), jnp.float32), "value": z, "return": z}

    policy, value = _forward_jit(
        obs.astype(jnp.float32),
        prepped["w1"], prepped["b1"], prepped["wh"], prepped["bh"],
        action_dim=A)
    # TODO(synk): base-class docstring shows scalar 0.0 for 'return'; emit a
    # (B,1) zeros array so downstream array-shaped consumers don't break.
    return {"policy": policy, "value": value, "return": jnp.zeros_like(value)}


def init_params(key, obs_dim, hidden, action_dim):
    k1, k2, k3 = jax.random.split(key, 3)
    scale1 = 1.0 / jnp.sqrt(obs_dim)
    scale2 = 1.0 / jnp.sqrt(hidden)
    return {
        "w1": jax.random.normal(k1, (obs_dim, hidden), jnp.float32) * scale1,
        "b1": jnp.zeros((1, hidden), jnp.float32),
        "wp": jax.random.normal(k2, (hidden, action_dim), jnp.float32) * scale2,
        "bp": jnp.zeros((1, action_dim), jnp.float32),
        "wv": jax.random.normal(k3, (hidden, 1), jnp.float32) * scale2,
        "bv": jnp.zeros((1, 1), jnp.float32),
    }


def _reference_forward(obs, params):
    """Plain-JAX reference mirroring the kernel's bf16-operand / f32-accum /
    bf16-output numerics."""
    obs_bf = obs.astype(jnp.bfloat16)
    w1_bf = params["w1"].astype(jnp.bfloat16)
    wp_bf = params["wp"].astype(jnp.bfloat16)
    wv_bf = params["wv"].astype(jnp.bfloat16)
    h = jnp.maximum(
        jnp.dot(obs_bf, w1_bf, preferred_element_type=jnp.float32) + params["b1"],
        0.0)
    h_bf = h.astype(jnp.bfloat16)
    p = jnp.dot(h_bf, wp_bf, preferred_element_type=jnp.float32) + params["bp"]
    v = jnp.dot(h_bf, wv_bf, preferred_element_type=jnp.float32) + params["bv"]
    # kernel writes bf16 then upcasts
    return (p.astype(jnp.bfloat16).astype(jnp.float32),
            v.astype(jnp.bfloat16).astype(jnp.float32))


if __name__ == "__main__":
    # Synthetic spaces: obs_dim=32 features, action_dist param dim = 16.
    OBS_DIM, HIDDEN, ACTION_DIM = 32, 32, 16

    key = jax.random.PRNGKey(0)
    k_obs, k_obs2, k_params = jax.random.split(key, 3)
    params = init_params(k_params, OBS_DIM, HIDDEN, ACTION_DIM)
    prepped, meta = prepare_params(params)

    # --- case 1: tiny rollout batch (single grid step) ---
    B1 = 8
    obs1 = jax.random.normal(k_obs, (B1, OBS_DIM), jnp.float32)
    out1 = model_base_forward(obs1, prepped, meta)
    jax.block_until_ready(out1["policy"])
    jax.block_until_ready(out1["value"])

    p_ref1, v_ref1 = _reference_forward(obs1, params)
    assert out1["policy"].shape == (B1, ACTION_DIM)
    assert out1["value"].shape == (B1, 1)
    assert out1["return"].shape == (B1, 1)
    assert jnp.allclose(out1["policy"], p_ref1, atol=1e-2, rtol=1e-2), "policy mismatch (B=8)"
    assert jnp.allclose(out1["value"], v_ref1, atol=1e-2, rtol=1e-2), "value mismatch (B=8)"

    # --- case 2: ragged batch (exercises padding + >=2 parallel grid steps) ---
    B2 = 37
    obs2 = jax.random.normal(k_obs2, (B2, OBS_DIM), jnp.float32)
    out2 = model_base_forward(obs2, prepped, meta)
    jax.block_until_ready(out2["policy"])

    p_ref2, v_ref2 = _reference_forward(obs2, params)
    assert out2["policy"].shape == (B2, ACTION_DIM)
    assert out2["value"].shape == (B2, 1)
    assert jnp.allclose(out2["policy"], p_ref2, atol=1e-2, rtol=1e-2), "policy mismatch (B=37)"
    assert jnp.allclose(out2["value"], v_ref2, atol=1e-2, rtol=1e-2), "value mismatch (B=37)"

    print("KERNEL_OK")
</pallas_src>

<mosaic_0001>
module attributes {stable_mosaic.version = 11 : i64} {
  func.func @_forward_kernel(%arg0: i32, %arg1: memref<8x32xf32, #tpu.memory_space<vmem>>, %arg2: memref<32x32xbf16, #tpu.memory_space<vmem>>, %arg3: memref<1x32xf32, #tpu.memory_space<vmem>>, %arg4: memref<32x128xbf16, #tpu.memory_space<vmem>>, %arg5: memref<1x128xf32, #tpu.memory_space<vmem>>, %arg6: memref<8x128xbf16, #tpu.memory_space<vmem>>) attributes {dimension_semantics = [#tpu.dimension_semantics<parallel>], iteration_bounds = array<i64: 1>, scalar_prefetch = 0 : i64, scratch_operands = 0 : i64, tpu.core_type = #tpu.core_type<tc>, window_params = [{transform_indices = @transform_0, window_bounds = array<i64: 8, 32>}, {pipeline_mode = #tpu.pipeline_mode<synchronous>, transform_indices = @transform_1, window_bounds = array<i64: 32, 32>}, {pipeline_mode = #tpu.pipeline_mode<synchronous>, transform_indices = @transform_2, window_bounds = array<i64: 1, 32>}, {pipeline_mode = #tpu.pipeline_mode<synchronous>, transform_indices = @transform_3, window_bounds = array<i64: 32, 128>}, {pipeline_mode = #tpu.pipeline_mode<synchronous>, transform_indices = @transform_4, window_bounds = array<i64: 1, 128>}, {transform_indices = @transform_5, window_bounds = array<i64: 8, 128>}]} {
    %c0 = arith.constant 0 : index
    %c0_0 = arith.constant 0 : index
    %0 = vector.load %arg1[%c0, %c0_0] : memref<8x32xf32, #tpu.memory_space<vmem>>, vector<8x32xf32>
    %1 = arith.truncf %0 : vector<8x32xf32> to vector<8x32xbf16>
    %c0_1 = arith.constant 0 : index
    %c0_2 = arith.constant 0 : index
    %2 = vector.load %arg2[%c0_1, %c0_2] : memref<32x32xbf16, #tpu.memory_space<vmem>>, vector<32x32xbf16>
    %cst = arith.constant dense<0.000000e+00> : vector<8x32xf32>
    %3 = tpu.matmul %1, %2, %cst {dimension_numbers = #tpu.dot_dimension_numbers<[1], [0], [0], [1], [0, 0, 1, 1], [], []>} : vector<8x32xbf16>, vector<32x32xbf16>, vector<8x32xf32> -> vector<8x32xf32>
    %c0_3 = arith.constant 0 : index
    %c0_4 = arith.constant 0 : index
    %4 = vector.load %arg3[%c0_3, %c0_4] : memref<1x32xf32, #tpu.memory_space<vmem>>, vector<1x32xf32>
    %5 = vector.broadcast %4 : vector<1x32xf32> to vector<8x32xf32>
    %6 = arith.addf %3, %5 : vector<8x32xf32>
    %cst_5 = arith.constant 0.000000e+00 : f32
    %7 = vector.broadcast %cst_5 : f32 to vector<8x32xf32>
    %8 = arith.maximumf %6, %7 : vector<8x32xf32>
    %9 = arith.truncf %8 : vector<8x32xf32> to vector<8x32xbf16>
    %c0_6 = arith.constant 0 : index
    %c0_7 = arith.constant 0 : index
    %10 = vector.load %arg4[%c0_6, %c0_7] : memref<32x128xbf16, #tpu.memory_space<vmem>>, vector<32x128xbf16>
    %cst_8 = arith.constant dense<0.000000e+00> : vector<8x128xf32>
    %11 = tpu.matmul %9, %10, %cst_8 {dimension_numbers = #tpu.dot_dimension_numbers<[1], [0], [0], [1], [0, 0, 1, 1], [], []>} : vector<8x32xbf16>, vector<32x128xbf16>, vector<8x128xf32> -> vector<8x128xf32>
    %c0_9 = arith.constant 0 : index
    %c0_10 = arith.constant 0 : index
    %12 = vector.load %arg5[%c0_9, %c0_10] : memref<1x128xf32, #tpu.memory_space<vmem>>, vector<1x128xf32>
    %13 = vector.broadcast %12 : vector<1x128xf32> to vector<8x128xf32>
    %14 = arith.addf %11, %13 : vector<8x128xf32>
    %15 = arith.truncf %14 : vector<8x128xf32> to vector<8x128xbf16>
    %c0_11 = arith.constant 0 : index
    %c0_12 = arith.constant 0 : index
    %16 = vector.load %arg6[%c0_11, %c0_12] : memref<8x128xbf16, #tpu.memory_space<vmem>>, vector<8x128xbf16>
    tpu.vector_store %arg6[%c0_11, %c0_12], %15 {strides = array<i32>} : memref<8x128xbf16, #tpu.memory_space<vmem>>, vector<8x128xbf16>,
    return
  }
  func.func @transform_0(%arg0: i32) -> (i32, i32) {
    %c0_i32 = arith.constant 0 : i32
    %c0_i32_0 = arith.constant 0 : i32
    return %arg0, %c0_i32 : i32, i32
  }
  func.func @transform_1(%arg0: i32) -> (i32, i32) {
    %c0_i32 = arith.constant 0 : i32
    %c0_i32_0 = arith.constant 0 : i32
    %c0_i32_1 = arith.constant 0 : i32
    return %c0_i32, %c0_i32_0 : i32, i32
  }
  func.func @transform_2(%arg0: i32) -> (i32, i32) {
    %c0_i32 = arith.constant 0 : i32
    %c0_i32_0 = arith.constant 0 : i32
    %c0_i32_1 = arith.constant 0 : i32
    return %c0_i32, %c0_i32_0 : i32, i32
  }
  func.func @transform_3(%arg0: i32) -> (i32, i32) {
    %c0_i32 = arith.constant 0 : i32
    %c0_i32_0 = arith.constant 0 : i32
    %c0_i32_1 = arith.constant 0 : i32
    return %c0_i32, %c0_i32_0 : i32, i32
  }
  func.func @transform_4(%arg0: i32) -> (i32, i32) {
    %c0_i32 = arith.constant 0 : i32
    %c0_i32_0 = arith.constant 0 : i32
    %c0_i32_1 = arith.constant 0 : i32
    return %c0_i32, %c0_i32_0 : i32, i32
  }
  func.func @transform_5(%arg0: i32) -> (i32, i32) {
    %c0_i32 = arith.constant 0 : i32
    %c0_i32_0 = arith.constant 0 : i32
    return %arg0, %c0_i32 : i32, i32
  }
}

</mosaic_0001>

<llo_original>
// kernel: _forward_jit.1
$region0: #{_forward_jit.1}
  #allocation0 [shape = 'u32[]', space=smem, size = 0x4, offset = 0x4, fixed_abs, tag = 'smem constant byte address 0x4 - core index']
  #allocation1 [shape = 'u32[144,128]{1,0:T(1,128)}', space=vmem, size = 0x12000, scoped, tag = 'internal scratch']
  %s0 = inlined_call_operand.hbm [shape: f32[8,32], index: 0, kind: input, shape index: {}]
  %s1 = inlined_call_operand.hbm [shape: bf16[32,32], index: 1, kind: input, shape index: {}]
  %s2 = inlined_call_operand.vmem [shape: f32[1,32], index: 2, kind: input, shape index: {}]
  %s3 = inlined_call_operand.hbm [shape: bf16[32,128], index: 3, kind: input, shape index: {}]
  %s4 = inlined_call_operand.vmem [shape: f32[1,128], index: 4, kind: input, shape index: {}]
  %s5 = inlined_call_operand.vmem [shape: bf16[8,128], index: 5, kind: output, shape index: {}]
  %s6 = sld [smem:[#allocation0]]
  $region42: #{_forward_jit.1} parent=0
    _
  %s8 = ssub.s32 1, %s6
  %s9 = scalar_select 0, %s8, %s6
  $region1: #{_forward_jit.1} parent=0
    #allocation2 [shape = 'u8[4096]{0}', space=vmem, size = 0x1000, scoped, tag = 'input window, operand 0, single buffered']
    #allocation3 [shape = 's32[1]{0}', space=sflag, size = 0x4, scoped, tag = 'scoped memory for _forward_jit.1']
    #allocation4 [shape = 'u8[8192]{0}', space=vmem, size = 0x2000, scoped, tag = 'input window, operand 1, single buffered']
    #allocation5 [shape = 's32[1]{0}', space=sflag, size = 0x4, scoped, tag = 'scoped memory for _forward_jit.1']
    #allocation6 [shape = 'u8[8192]{0}', space=vmem, size = 0x2000, scoped, tag = 'input window, operand 3, single buffered']
    %10 = vsyncpa [#allocation3], 0
    %11 = vsyncpa [#allocation5], 0
    // Predicated region
    $region2: #{_forward_jit.1} parent=1 // pred_check
      _
    $region3: #{_forward_jit.1} parent=1 // pred_check_branch
      %13 = sbr.rel (0) target = $region5
    $region4: #{_forward_jit.1} parent=1 // pred_region
      %s15 = ssub.s32 128, 128
      %16 = vsyncadd [#allocation3], %s15
      %s18 = sshll.u32 [#allocation2], 4
      %s19 = int_to_ptr.vmem [resolvable:$true] %s18
      %21 = dma.hbm_to_vmem [thread:$0]  %s0, 128, %s19, [#allocation3]
    $region5: #{_forward_jit.1} parent=1 // pred_fallthru
      _
    // Predicated region
    $region6: #{_forward_jit.1} parent=1 // pred_check
      _
    $region7: #{_forward_jit.1} parent=1 // pred_check_branch
      %23 = sbr.rel (0) target = $region9
    $region8: #{_forward_jit.1} parent=1 // pred_region
      %s25 = ssub.s32 256, 256
      %26 = vsyncadd [#allocation5], %s25
      %s27 = sshll.u32 [#allocation4], 4
      %s28 = int_to_ptr.vmem [resolvable:$true] %s27
      %33 = dma.hbm_to_vmem [thread:$0]  %s1, 256, %s28, [#allocation5], 64, 64, 4
    $region9: #{_forward_jit.1} parent=1 // pred_fallthru
      _
    // Predicated region
    $region10: #{_forward_jit.1} parent=1 // pred_check
      _
    $region11: #{_forward_jit.1} parent=1 // pred_check_branch
      %35 = sbr.rel (0) target = $region13
    $region12: #{_forward_jit.1} parent=1 // pred_region
      _
    $region13: #{_forward_jit.1} parent=1 // pred_fallthru
      _
    // Predicated region
    $region14: #{_forward_jit.1} parent=1 // pred_check
      _
    $region15: #{_forward_jit.1} parent=1 // pred_check_branch
      %37 = sbr.rel (0) target = $region17
    $region16: #{_forward_jit.1} parent=1 // pred_region
      %s39 = ssub.s32 256, 256
      %40 = vsyncadd [#allocation5], %s39
      %s41 = sshll.u32 [#allocation6], 4
      %s42 = int_to_ptr.vmem [resolvable:$true] %s41
      %47 = dma.hbm_to_vmem [thread:$0]  %s3, 256, %s42, [#allocation5], 64, 64, 4
    $region17: #{_forward_jit.1} parent=1 // pred_fallthru
      _
    // Predicated region
    $region18: #{_forward_jit.1} parent=1 // pred_check
      _
    $region19: #{_forward_jit.1} parent=1 // pred_check_branch
      %49 = sbr.rel (0) target = $region21
    $region20: #{_forward_jit.1} parent=1 // pred_region
      _
    $region21: #{_forward_jit.1} parent=1 // pred_fallthru
      _
    // Predicated region
    $region22: #{_forward_jit.1} parent=1 // pred_check
      _
    $region23: #{_forward_jit.1} parent=1 // pred_check_branch
      %51 = sbr.rel (0) target = $region25
    $region24: #{_forward_jit.1} parent=1 // pred_region
      %52 = dma.done [#allocation3], 128
    $region25: #{_forward_jit.1} parent=1 // pred_fallthru
      _
    // Predicated region
    $region26: #{_forward_jit.1} parent=1 // pred_check
      _
    $region27: #{_forward_jit.1} parent=1 // pred_check_branch
      %54 = sbr.rel (0) target = $region29
    $region28: #{_forward_jit.1} parent=1 // pred_region
      %55 = dma.done [#allocation5], 256
    $region29: #{_forward_jit.1} parent=1 // pred_fallthru
      _
    // Predicated region
    $region30: #{_forward_jit.1} parent=1 // pred_check
      _
    $region31: #{_forward_jit.1} parent=1 // pred_check_branch
      %57 = sbr.rel (0) target = $region33
    $region32: #{_forward_jit.1} parent=1 // pred_region
      %58 = dma.done [#allocation5], 256
    $region33: #{_forward_jit.1} parent=1 // pred_fallthru
      _
    %v60 = vld [vmem:[#allocation2] sm:$0xff]
    %v61 = vpack.c.bf16 %v60, %v60
    %v62 = vld [vmem:[#allocation4] sm:$0xf]
    %v63 = vld [vmem:[#allocation4 + $0x4] sm:$0xf]
    %v64 = vld [vmem:[#allocation4 + $0x8] sm:$0xf]
    %v65 = vld [vmem:[#allocation4 + $0xc] sm:$0xf]
    %v66 = vld [vmem:[%s2] sm:$0x1]
    %v68 = vlaneseq
    %v69 = vshrl.u32 %v68, 7
    %v70 = vsub.s32 0, %v69
    %v71 = vrot.slane %v66, %v70
    %v77 = vunpack.c.l.b16 %v62
    %v78 = vunpack.c.l.b16 %v63
    %v79 = vunpack.c.l.b16 %v64
    %v80 = vunpack.c.l.b16 %v65
    %v81 = vpack.c.b16 %v78, %v77
    %v82 = vpack.c.b16 %v80, %v79
    %vm85 = vcmask 261120
    %v87 = vsel %vm85, %v61, 0
    %89 = vmatprep.subr.bf16.mxu0 0
    %90 = vmatpush1.bf16.msra.mxu0 0
    %91 = vmatprep.subr.bf16.mxu0 0
    %92 = vmatpush1.bf16.msra.mxu0 0
    %93 = vmatprep.subr.bf16.mxu0 0
    %94 = vmatpush1.bf16.msra.mxu0 0
    %95 = vmatprep.subr.bf16.mxu0 0
    %96 = vmatpush1.bf16.msra.mxu0 0
    %97 = vmatprep.subr.bf16.mxu0 0
    %98 = vmatpush1.bf16.msra.mxu0 0
    %99 = vmatprep.subr.bf16.mxu0 0
    %100 = vmatpush1.bf16.msra.mxu0 0
    %101 = vmatprep.subr.bf16.mxu0 0
    %102 = vmatpush1.bf16.msra.mxu0 %v82
    %103 = vmatprep.subr.bf16.mxu0 0
    %104 = vmatpush1.bf16.msra.mxu0 %v81
    %105 = vmatprep.subr.bf16.mxu0 0
    %106 = vmatpush2.bf16.msra.mxu0 0
    %107 = vmatprep.subr.bf16.mxu0 0
    %108 = vmatpush2.bf16.msra.mxu0 0
    %109 = vmatprep.subr.bf16.mxu0 0
    %110 = vmatpush2.bf16.msra.mxu0 0
    %111 = vmatprep.subr.bf16.mxu0 0
    %112 = vmatpush2.bf16.msra.mxu0 0
    %113 = vmatprep.subr.bf16.mxu0 0
    %114 = vmatpush2.bf16.msra.mxu0 0
    %115 = vmatprep.subr.bf16.mxu0 0
    %116 = vmatpush2.bf16.msra.mxu0 0
    %117 = vmatprep.subr.bf16.mxu0 0
    %118 = vmatpush2.bf16.msra.mxu0 0
    %119 = vmatprep.subr.bf16.mxu0 0
    %120 = vmatpush2.bf16.msra.mxu0 0
    %121 = vmatprep.mubr.bf16.mxu0 0
    %122 = vmatmul.mubr.bf16.gmra.mxu0 %v87
    %v123 = vpop.f32.mrf.mxu0
    %v124 = vadd.f32 %v71, %v123
    %v125 = vpop.f32.mrf.mxu0
    %v126 = vpop.f32.mrf.mxu0
    %v127 = vpop.f32.mrf.mxu0
    %128 = vdwg.mxu0
    %v129 = vmax.f32 %v124, 0.0
    %v130 = vpack.c.bf16 %v129, %v129
    %v131 = vld [vmem:[#allocation6] sm:$0xf]
    %v132 = vld [vmem:[#allocation6 + $0x4] sm:$0xf]
    %v133 = vld [vmem:[#allocation6 + $0x8] sm:$0xf]
    %v134 = vld [vmem:[#allocation6 + $0xc] sm:$0xf]
    %v135 = vld [vmem:[%s4] sm:$0x1]
    %v137 = vlaneseq
    %v138 = vshrl.u32 %v137, 7
    %v139 = vsub.s32 0, %v138
    %v140 = vrot.slane %v135, %v139
    %v146 = vunpack.c.l.b16 %v131
    %v147 = vunpack.c.l.b16 %v132
    %v148 = vunpack.c.l.b16 %v133
    %v149 = vunpack.c.l.b16 %v134
    %v150 = vpack.c.b16 %v147, %v146
    %v151 = vpack.c.b16 %v149, %v148
    %v155 = vsel %vm85, %v130, 0
    %157 = vmatprep.subr.bf16.mxu0 0
    %158 = vmatpush1.bf16.msra.mxu0 0
    %159 = vmatprep.subr.bf16.mxu0 0
    %160 = vmatpush1.bf16.msra.mxu0 0
    %161 = vmatprep.subr.bf16.mxu0 0
    %162 = vmatpush1.bf16.msra.mxu0 0
    %163 = vmatprep.subr.bf16.mxu0 0
    %164 = vmatpush1.bf16.msra.mxu0 0
    %165 = vmatprep.subr.bf16.mxu0 0
    %166 = vmatpush1.bf16.msra.mxu0 0
    %167 = vmatprep.subr.bf16.mxu0 0
    %168 = vmatpush1.bf16.msra.mxu0 0
    %169 = vmatprep.subr.bf16.mxu0 0
    %170 = vmatpush1.bf16.msra.mxu0 %v151
    %171 = vmatprep.subr.bf16.mxu0 0
    %172 = vmatpush1.bf16.msra.mxu0 %v150
    %173 = vmatprep.subr.bf16.mxu0 0
    %174 = vmatpush2.bf16.msra.mxu0 0
    %175 = vmatprep.subr.bf16.mxu0 0
    %176 = vmatpush2.bf16.msra.mxu0 0
    %177 = vmatprep.subr.bf16.mxu0 0
    %178 = vmatpush2.bf16.msra.mxu0 0
    %179 = vmatprep.subr.bf16.mxu0 0
    %180 = vmatpush2.bf16.msra.mxu0 0
    %181 = vmatprep.subr.bf16.mxu0 0
    %182 = vmatpush2.bf16.msra.mxu0 0
    %183 = vmatprep.subr.bf16.mxu0 0
    %184 = vmatpush2.bf16.msra.mxu0 0
    %185 = vmatprep.subr.bf16.mxu0 0
    %186 = vmatpush2.bf16.msra.mxu0 0
    %187 = vmatprep.subr.bf16.mxu0 0
    %188 = vmatpush2.bf16.msra.mxu0 0
    %189 = vmatprep.mubr.bf16.mxu0 0
    %190 = vmatmul.mubr.bf16.gmra.mxu0 %v155
    %v191 = vpop.f32.mrf.mxu0
    %v192 = vadd.f32 %v140, %v191
    %v193 = vpop.f32.mrf.mxu0
    %v194 = vpop.f32.mrf.mxu0
    %v195 = vpop.f32.mrf.mxu0
    %196 = vdwg.mxu0
    %v197 = vpack.c.bf16 %v192, %v192
    %198 = vst [vmem:[%s5] sm:$0xf] %v197
    // Predicated region
    $region34: #{_forward_jit.1} parent=1 // pred_check
      _
    $region35: #{_forward_jit.1} parent=1 // pred_check_branch
      %200 = sbr.rel (0) target = $region37
    $region36: #{_forward_jit.1} parent=1 // pred_region
      _
    $region37: #{_forward_jit.1} parent=1 // pred_fallthru
      _
    // Predicated region
    $region38: #{_forward_jit.1} parent=1 // pred_check
      _
    $region39: #{_forward_jit.1} parent=1 // pred_check_branch
      %202 = sbr.rel (0) target = $region41
    $region40: #{_forward_jit.1} parent=1 // pred_region
      _
    $region41: #{_forward_jit.1} parent=1 // pred_fallthru
      _
    %203 = vsyncpa [#allocation3], 1
    %204 = vsyncpa [#allocation5], 1

</llo_original>
